<compile_context>
chip_gen: v5e
topology: v5e:2x2
jax: 0.10.0
libtpu: 0.0.40
codegen_flags: <defaults>
</compile_context>

<pallas_src>
import jax
import jax.numpy as jnp
from jax.experimental import pallas as pl
from jax.experimental.pallas import tpu as pltpu


ROW_Q = 16     # sublane quantum (bf16 rows pack in pairs)
LANE_Q = 128   # lane quantum


def _round_up(a, q):
    return ((a + q - 1) // q) * q


# ----------------------------------------------------------------------------
# Kernel: one (tm, D) row tile x one tf-wide slice of the hidden dimension.
# Grid = (row tiles [parallel], F tiles [arbitrary / reduction]).
# ----------------------------------------------------------------------------
def ffn_kernel(x_ref, w1_ref, b1_ref, w2_ref, b2_ref, o_ref, acc_ref):
    f = pl.program_id(1)

    @pl.when(f == 0)
    def _init():
        acc_ref[...] = jnp.zeros_like(acc_ref)

    # First linear (bf16 MXU, f32 accumulation) + bias + ReLU for this F-slice.
    h = jnp.dot(x_ref[...], w1_ref[...], preferred_element_type=jnp.float32)
    h = jnp.maximum(h + b1_ref[...], 0.0)

    # Second linear: contract this F-slice of w2 rows into the f32 accumulator.
    acc_ref[...] += jnp.dot(h.astype(w2_ref.dtype), w2_ref[...],
                            preferred_element_type=jnp.float32)

    @pl.when(f == pl.num_programs(1) - 1)
    def _finalize():
        o_ref[...] = (acc_ref[...] + b2_ref[...]).astype(o_ref.dtype)


# ----------------------------------------------------------------------------
# Wrapper
# ----------------------------------------------------------------------------
def _vmem_bytes(tm, tf, d, cbytes, obytes):
    """Double-buffered working-set estimate for the chosen tiles."""
    w = 2 * 2 * d * tf * cbytes            # w1 + w2 tiles, double-buffered
    bias = 2 * (tf + d) * 4                # b1 + b2 (f32), double-buffered
    xio = 2 * tm * d * (cbytes + obytes)   # x tile in + out tile, double-buffered
    acc = tm * d * 4                       # f32 accumulator scratch
    return w + bias + xio + acc


def feed_forward(x, w1, b1, w2, b2, *, tile_rows=512, tile_f=1024,
                 compute_dtype=jnp.bfloat16):
    """x: (B, S, D).  w1: (D, F), b1: (1, F), w2: (F, D), b2: (1, D).

    Weights are stored pre-transposed (in_features, out_features), matching
    nn.Linear's math `x @ W.T + b` with W.T materialized once outside.
    """
    B, S, D = x.shape
    F = w1.shape[1]
    M = B * S
    out_dtype = x.dtype
    cbytes = jnp.dtype(compute_dtype).itemsize
    obytes = jnp.dtype(out_dtype).itemsize

    # Per-chip VMEM budget (conservative fallback = v7x's 64 MiB per core).
    try:
        vmem_cap = int(pltpu.get_tpu_info().vmem_capacity_bytes)
    except Exception:
        vmem_cap = 64 << 20
    budget = max(min(vmem_cap - (8 << 20), 100 << 20), 32 << 20)

    # Row tile: quantized to 16, and capped at ~half the rows so the
    # "parallel" row axis always yields >= 2 tiles (v7x dual-TC sharding).
    tm = min(_round_up(max(tile_rows, ROW_Q), ROW_Q),
             max(ROW_Q, _round_up(-(-M // 2), ROW_Q)))
    # Hidden (reduction) tile: lane-quantized, no larger than padded F.
    tf = min(_round_up(max(tile_f, LANE_Q), LANE_Q), _round_up(F, LANE_Q))

    # Shrink tiles until the double-buffered working set fits the budget.
    while _vmem_bytes(tm, tf, D, cbytes, obytes) > budget and tf > LANE_Q:
        tf -= LANE_Q
    while _vmem_bytes(tm, tf, D, cbytes, obytes) > budget and tm > ROW_Q:
        tm -= ROW_Q

    M_pad = _round_up(M, tm)
    F_pad = _round_up(F, tf)

    # Zero padding is exact here: relu(0*x + 0) = 0 and zero w2 rows add 0.
    x2 = x.reshape(M, D).astype(compute_dtype)
    if M_pad != M:
        x2 = jnp.pad(x2, ((0, M_pad - M), (0, 0)))
    w1c = w1.astype(compute_dtype)
    w2c = w2.astype(compute_dtype)
    b1c = b1.astype(jnp.float32)
    b2c = b2.astype(jnp.float32)
    if F_pad != F:
        w1c = jnp.pad(w1c, ((0, 0), (0, F_pad - F)))
        b1c = jnp.pad(b1c, ((0, 0), (0, F_pad - F)))
        w2c = jnp.pad(w2c, ((0, F_pad - F), (0, 0)))

    n_row_tiles = M_pad // tm
    n_f_tiles = F_pad // tf

    needed = _vmem_bytes(tm, tf, D, cbytes, obytes)
    vmem_limit = int(min(budget, max(needed + (8 << 20), 32 << 20)))

    cost = pl.CostEstimate(
        flops=4 * M_pad * D * F_pad,
        transcendentals=0,
        bytes_accessed=(M_pad * D * (cbytes + obytes)
                        + n_row_tiles * 2 * D * F_pad * cbytes
                        + (F_pad + D) * 4),
    )

    out = pl.pallas_call(
        ffn_kernel,
        out_shape=jax.ShapeDtypeStruct((M_pad, D), out_dtype),
        grid=(n_row_tiles, n_f_tiles),
        in_specs=[
            pl.BlockSpec((tm, D), lambda i, f: (i, 0)),   # x rows (resident over f)
            pl.BlockSpec((D, tf), lambda i, f: (0, f)),   # w1 column slice
            pl.BlockSpec((1, tf), lambda i, f: (0, f)),   # b1 slice
            pl.BlockSpec((tf, D), lambda i, f: (f, 0)),   # w2 row slice
            pl.BlockSpec((1, D), lambda i, f: (0, 0)),    # b2 (constant block)
        ],
        out_specs=pl.BlockSpec((tm, D), lambda i, f: (i, 0)),
        scratch_shapes=[pltpu.VMEM((tm, D), jnp.float32)],
        compiler_params=pltpu.CompilerParams(
            dimension_semantics=("parallel", "arbitrary"),
            vmem_limit_bytes=vmem_limit),
        cost_estimate=cost,
    )(x2, w1c, b1c, w2c, b2c)

    return out[:M].reshape(B, S, D)


# ----------------------------------------------------------------------------
# Pure-JAX reference (f32) for numerical sanity checks
# ----------------------------------------------------------------------------
def feed_forward_ref(x, w1, b1, w2, b2):
    h = jnp.maximum(x @ w1 + b1[0], 0.0)
    return h @ w2 + b2[0]


# ----------------------------------------------------------------------------
# Driver
# ----------------------------------------------------------------------------
if __name__ == "__main__":
    # Small but non-trivial: M = B*S = 48 rows, F = 320 hidden units so the
    # forced-small-tile run exercises multiple row tiles AND multiple F
    # (reduction) tiles with padding on both axes.
    B, S, D, F = 2, 24, 64, 320

    key = jax.random.PRNGKey(0)
    kx, k1, k2, k3, k4 = jax.random.split(key, 5)
    x = jax.random.normal(kx, (B, S, D), jnp.float32)
    # nn.Linear weights stored pre-transposed: (in_features, out_features).
    w1 = 0.05 * jax.random.normal(k1, (D, F), jnp.float32)
    b1 = 0.01 * jax.random.normal(k2, (1, F), jnp.float32)
    w2 = 0.05 * jax.random.normal(k3, (F, D), jnp.float32)
    b2 = 0.01 * jax.random.normal(k4, (1, D), jnp.float32)

    ref = feed_forward_ref(x, w1, b1, w2, b2)

    # 1) Forced small tiles: multi-row-tile + multi-F-tile accumulator path,
    #    with padding on M and F.
    out_tiled = feed_forward(x, w1, b1, w2, b2, tile_rows=16, tile_f=128)
    out_tiled = jax.block_until_ready(out_tiled)
    assert out_tiled.shape == (B, S, D)
    assert jnp.allclose(out_tiled, ref, atol=2e-2, rtol=2e-2), (
        float(jnp.max(jnp.abs(out_tiled - ref))))

    # 2) Default (production) tiling.
    out_default = feed_forward(x, w1, b1, w2, b2)
    out_default = jax.block_until_ready(out_default)
    assert out_default.shape == (B, S, D)
    assert jnp.allclose(out_default, ref, atol=2e-2, rtol=2e-2), (
        float(jnp.max(jnp.abs(out_default - ref))))

    print("KERNEL_OK")
</pallas_src>

<mosaic_0001>
module attributes {stable_mosaic.version = 11 : i64} {
  func.func @ffn_kernel(%arg0: i32, %arg1: i32, %arg2: memref<16x64xbf16, #tpu.memory_space<vmem>>, %arg3: memref<64x128xbf16, #tpu.memory_space<vmem>>, %arg4: memref<1x128xf32, #tpu.memory_space<vmem>>, %arg5: memref<128x64xbf16, #tpu.memory_space<vmem>>, %arg6: memref<1x64xf32, #tpu.memory_space<vmem>>, %arg7: memref<16x64xf32, #tpu.memory_space<vmem>>, %arg8: memref<16x64xf32, #tpu.memory_space<vmem>>) attributes {dimension_semantics = [#tpu.dimension_semantics<parallel>, #tpu.dimension_semantics<arbitrary>], iteration_bounds = array<i64: 3, 3>, scalar_prefetch = 0 : i64, scratch_operands = 1 : i64, tpu.core_type = #tpu.core_type<tc>, window_params = [{transform_indices = @transform_0, window_bounds = array<i64: 16, 64>}, {transform_indices = @transform_1, window_bounds = array<i64: 64, 128>}, {transform_indices = @transform_2, window_bounds = array<i64: 1, 128>}, {transform_indices = @transform_3, window_bounds = array<i64: 128, 64>}, {pipeline_mode = #tpu.pipeline_mode<synchronous>, transform_indices = @transform_4, window_bounds = array<i64: 1, 64>}, {transform_indices = @transform_5, window_bounds = array<i64: 16, 64>}]} {
    %c0_i32 = arith.constant 0 : i32
    %0 = arith.cmpi eq, %arg1, %c0_i32 : i32
    %1 = arith.extui %0 : i1 to i32
    %c0_i32_0 = arith.constant 0 : i32
    %2 = arith.cmpi ne, %1, %c0_i32_0 : i32
    scf.if %2 {
      %cst_15 = arith.constant 0.000000e+00 : f32
      %20 = vector.broadcast %cst_15 : f32 to vector<16x64xf32>
      %c0_16 = arith.constant 0 : index
      %c0_17 = arith.constant 0 : index
      %21 = vector.load %arg8[%c0_16, %c0_17] : memref<16x64xf32, #tpu.memory_space<vmem>>, vector<16x64xf32>
      tpu.vector_store %arg8[%c0_16, %c0_17], %20 {strides = array<i32>} : memref<16x64xf32, #tpu.memory_space<vmem>>, vector<16x64xf32>,
    } else {
    }
    %c0 = arith.constant 0 : index
    %c0_1 = arith.constant 0 : index
    %3 = vector.load %arg2[%c0, %c0_1] : memref<16x64xbf16, #tpu.memory_space<vmem>>, vector<16x64xbf16>
    %c0_2 = arith.constant 0 : index
    %c0_3 = arith.constant 0 : index
    %4 = vector.load %arg3[%c0_2, %c0_3] : memref<64x128xbf16, #tpu.memory_space<vmem>>, vector<64x128xbf16>
    %cst = arith.constant dense<0.000000e+00> : vector<16x128xf32>
    %5 = tpu.matmul %3, %4, %cst {dimension_numbers = #tpu.dot_dimension_numbers<[1], [0], [0], [1], [0, 0, 1, 1], [], []>} : vector<16x64xbf16>, vector<64x128xbf16>, vector<16x128xf32> -> vector<16x128xf32>
    %c0_4 = arith.constant 0 : index
    %c0_5 = arith.constant 0 : index
    %6 = vector.load %arg4[%c0_4, %c0_5] : memref<1x128xf32, #tpu.memory_space<vmem>>, vector<1x128xf32>
    %7 = vector.broadcast %6 : vector<1x128xf32> to vector<16x128xf32>
    %8 = arith.addf %5, %7 : vector<16x128xf32>
    %cst_6 = arith.constant 0.000000e+00 : f32
    %9 = vector.broadcast %cst_6 : f32 to vector<16x128xf32>
    %10 = arith.maximumf %8, %9 : vector<16x128xf32>
    %c0_7 = arith.constant 0 : index
    %c0_8 = arith.constant 0 : index
    %11 = vector.load %arg8[%c0_7, %c0_8] : memref<16x64xf32, #tpu.memory_space<vmem>>, vector<16x64xf32>
    %12 = arith.truncf %10 : vector<16x128xf32> to vector<16x128xbf16>
    %c0_9 = arith.constant 0 : index
    %c0_10 = arith.constant 0 : index
    %13 = vector.load %arg5[%c0_9, %c0_10] : memref<128x64xbf16, #tpu.memory_space<vmem>>, vector<128x64xbf16>
    %cst_11 = arith.constant dense<0.000000e+00> : vector<16x64xf32>
    %14 = tpu.matmul %12, %13, %cst_11 {dimension_numbers = #tpu.dot_dimension_numbers<[1], [0], [0], [1], [0, 0, 1, 1], [], []>} : vector<16x128xbf16>, vector<128x64xbf16>, vector<16x64xf32> -> vector<16x64xf32>
    %15 = arith.addf %11, %14 : vector<16x64xf32>
    %c0_12 = arith.constant 0 : index
    %c0_13 = arith.constant 0 : index
    %16 = vector.load %arg8[%c0_12, %c0_13] : memref<16x64xf32, #tpu.memory_space<vmem>>, vector<16x64xf32>
    tpu.vector_store %arg8[%c0_12, %c0_13], %15 {strides = array<i32>} : memref<16x64xf32, #tpu.memory_space<vmem>>, vector<16x64xf32>,
    %c2_i32 = arith.constant 2 : i32
    %17 = arith.cmpi eq, %arg1, %c2_i32 : i32
    %18 = arith.extui %17 : i1 to i32
    %c0_i32_14 = arith.constant 0 : i32
    %19 = arith.cmpi ne, %18, %c0_i32_14 : i32
    scf.if %19 {
      %c0_15 = arith.constant 0 : index
      %c0_16 = arith.constant 0 : index
      %20 = vector.load %arg8[%c0_15, %c0_16] : memref<16x64xf32, #tpu.memory_space<vmem>>, vector<16x64xf32>
      %c0_17 = arith.constant 0 : index
      %c0_18 = arith.constant 0 : index
      %21 = vector.load %arg6[%c0_17, %c0_18] : memref<1x64xf32, #tpu.memory_space<vmem>>, vector<1x64xf32>
      %22 = vector.broadcast %21 : vector<1x64xf32> to vector<16x64xf32>
      %23 = arith.addf %20, %22 : vector<16x64xf32>
      %c0_19 = arith.constant 0 : index
      %c0_20 = arith.constant 0 : index
      %24 = vector.load %arg7[%c0_19, %c0_20] : memref<16x64xf32, #tpu.memory_space<vmem>>, vector<16x64xf32>
      tpu.vector_store %arg7[%c0_19, %c0_20], %23 {strides = array<i32>} : memref<16x64xf32, #tpu.memory_space<vmem>>, vector<16x64xf32>,
    } else {
    }
    return
  }
  func.func @transform_0(%arg0: i32, %arg1: i32) -> (i32, i32) {
    %c0_i32 = arith.constant 0 : i32
    %c0_i32_0 = arith.constant 0 : i32
    return %arg0, %c0_i32 : i32, i32
  }
  func.func @transform_1(%arg0: i32, %arg1: i32) -> (i32, i32) {
    %c0_i32 = arith.constant 0 : i32
    %c0_i32_0 = arith.constant 0 : i32
    return %c0_i32, %arg1 : i32, i32
  }
  func.func @transform_2(%arg0: i32, %arg1: i32) -> (i32, i32) {
    %c0_i32 = arith.constant 0 : i32
    %c0_i32_0 = arith.constant 0 : i32
    return %c0_i32, %arg1 : i32, i32
  }
  func.func @transform_3(%arg0: i32, %arg1: i32) -> (i32, i32) {
    %c0_i32 = arith.constant 0 : i32
    %c0_i32_0 = arith.constant 0 : i32
    return %arg1, %c0_i32 : i32, i32
  }
  func.func @transform_4(%arg0: i32, %arg1: i32) -> (i32, i32) {
    %c0_i32 = arith.constant 0 : i32
    %c0_i32_0 = arith.constant 0 : i32
    %c0_i32_1 = arith.constant 0 : i32
    return %c0_i32, %c0_i32_0 : i32, i32
  }
  func.func @transform_5(%arg0: i32, %arg1: i32) -> (i32, i32) {
    %c0_i32 = arith.constant 0 : i32
    %c0_i32_0 = arith.constant 0 : i32
    return %arg0, %c0_i32 : i32, i32
  }
}

</mosaic_0001>

<llo_original>
// kernel: tpu_custom_call.1
$region0: #{tpu_custom_call.1}
  #allocation0 [shape = 'u32[]', space=smem, size = 0x4, offset = 0x4, fixed_abs, tag = 'smem constant byte address 0x4 - core index']
  #allocation1 [shape = 'u32[72,128]{1,0:T(1,128)}', space=vmem, size = 0x9000, scoped, tag = 'internal scratch']
  #allocation2 [shape = 'f32[16,64]{1,0:T(8,128)}', space=vmem, size = 0x2000, scoped, tag = 'scratch operand']
  %s0 = inlined_call_operand.vmem [shape: bf16[48,64], index: 0, kind: input, shape index: {}]
  %s1 = inlined_call_operand.vmem [shape: bf16[64,384], index: 1, kind: input, shape index: {}]
  %s2 = inlined_call_operand.vmem [shape: f32[1,384], index: 2, kind: input, shape index: {}]
  %s3 = inlined_call_operand.vmem [shape: bf16[384,64], index: 3, kind: input, shape index: {}]
  %s4 = inlined_call_operand.vmem [shape: f32[1,64], index: 4, kind: input, shape index: {}]
  %s5 = inlined_call_operand.hbm [shape: f32[48,64], index: 5, kind: output, shape index: {}]
  %s6 = sld [smem:[#allocation0]]
  $region102: #{tpu_custom_call.1} parent=0
    _
  %s8 = ssub.s32 1, %s6
  %s9 = scalar_select 0, %s8, %s6
  $region1: #{tpu_custom_call.1} parent=0
    #allocation3 [shape = 'u8[32768]{0}', space=vmem, size = 0x8000, scoped, tag = 'input window, operand 1']
    #allocation4 [shape = 'u8[16384]{0}', space=vmem, size = 0x4000, scoped, tag = 'output window, operand 0']
    #allocation5 [shape = 's32[2]{0}', space=sflag, size = 0x8, scoped, tag = 'scoped memory for tpu_custom_call.1']
    %10 = vsyncpa [#allocation5], 0
    %s11 = scalar_lea.sflag [#allocation5], 1
    %12 = vsyncpa %s11, 0
    loop: start=0, step=1, limit=11
    $region2: #{tpu_custom_call.1} parent=1 // loop_pre_header
      _
    $region3: #{tpu_custom_call.1} parent=1 // loop_header
      %s14 = sphi 0, %s18
      %p15 = scmp.ge.s32.totalorder %s14, 11
      %s21 = sphi 0, %s33
      %s22 = sphi 0, %s29
      %s23 = sphi 0, %s21
      %s24 = sphi 0, %s22
      %s25 = sphi 0, %s23
      %s26 = sphi 0, %s24
      %s36 = sphi 0, %s38
      %s39 = sphi 0, %s36
      %s40 = sphi 0, %s39
      %s56 = sphi 0, %s40
      %s62 = sphi 0, %s64
      %s65 = sphi 0, %s62
      %s66 = sphi 0, %s65
      %s82 = sphi 0, %s66
      %s88 = sphi 0, %s90
      %s91 = sphi 0, %s88
      %s92 = sphi 0, %s91
      %s108 = sphi 0, %s92
      %s114 = sphi 0, %s116
      %s117 = sphi 0, %s114
      %s118 = sphi 0, %s117
      %s134 = sphi 0, %s118
      %s138 = sphi 0, %s138
      %s140 = sphi 0, %s138
      %s141 = sphi 0, %s140
      %s155 = sphi 0, %s141
      %s161 = sphi 0, %s163
      %s164 = sphi 0, %s161
      %s165 = sphi 0, %s164
      %s181 = sphi 0, %s165
    $region4: #{tpu_custom_call.1} parent=1 // loop_header_branch
      %17 = sbr.rel (%p15) target = $region8
    $region5: #{tpu_custom_call.1} parent=1 // loop_body
      %s19 = ssub.s32 %s14, 1
      %s20 = ssub.s32 %s14, 2
      %s27 = sadd.s32 1, %s22
      %p28 = scmp.ge.s32.totalorder %s27, 3
      %s29 = scalar_select %p28, 0, %s27
      %s30 = sadd.s32 1, %s21
      %s31 = scalar_select %p28, %s30, %s21
      %p32 = scmp.ge.s32.totalorder %s31, 3
      %s33 = scalar_select %p32, 0, %s31
      %s34 = ssub.s32 %s21, %s33
      %p35 = scmp.eq.s32.totalorder %s34, 0
      %s37 = sadd.s32 %s36, 1
      %s38 = scalar_select %p35, %s36, %s37
      %p41 = pneg %p35
      %p42 = scmp.eq.s32.totalorder %s14, 8
      %p43 = por %p41, %p42
      %p44 = scmp.ne.s32.totalorder %s36, %s39
      %p45 = scmp.eq.s32.totalorder %s14, 0
      %p46 = por %p44, %p45
      %p47 = scmp.ne.s32.totalorder %s36, %s39
      %p48 = scmp.eq.s32.totalorder %s19, 8
      %p49 = por %p47, %p48
      %p50 = scmp.ne.s32.totalorder %s39, %s40
      %p51 = scmp.eq.s32.totalorder %s19, 0
      %p52 = por %p50, %p51
      %p53 = scmp.ne.s32.totalorder %s39, %s40
      %p54 = scmp.eq.s32.totalorder %s20, 8
      %p55 = por %p53, %p54
      %p57 = scmp.ne.s32.totalorder %s40, %s56
      %p58 = scmp.eq.s32.totalorder %s20, 0
      %p59 = por %p57, %p58
      %s60 = ssub.s32 %s22, %s29
      %p61 = scmp.eq.s32.totalorder %s60, 0
      %s63 = sadd.s32 %s62, 1
      %s64 = scalar_select %p61, %s62, %s63
      %p67 = pneg %p61
      %p68 = scmp.eq.s32.totalorder %s14, 8
      %p69 = por %p67, %p68
      %p70 = scmp.ne.s32.totalorder %s62, %s65
      %p71 = scmp.eq.s32.totalorder %s14, 0
      %p72 = por %p70, %p71
      %p73 = scmp.ne.s32.totalorder %s62, %s65
      %p74 = scmp.eq.s32.totalorder %s19, 8
      %p75 = por %p73, %p74
      %p76 = scmp.ne.s32.totalorder %s65, %s66
      %p77 = scmp.eq.s32.totalorder %s19, 0
      %p78 = por %p76, %p77
      %p79 = scmp.ne.s32.totalorder %s65, %s66
      %p80 = scmp.eq.s32.totalorder %s20, 8
      %p81 = por %p79, %p80
      %p83 = scmp.ne.s32.totalorder %s66, %s82
      %p84 = scmp.eq.s32.totalorder %s20, 0
      %p85 = por %p83, %p84
      %s86 = ssub.s32 %s22, %s29
      %p87 = scmp.eq.s32.totalorder %s86, 0
      %s89 = sadd.s32 %s88, 1
      %s90 = scalar_select %p87, %s88, %s89
      %p93 = pneg %p87
      %p94 = scmp.eq.s32.totalorder %s14, 8
      %p95 = por %p93, %p94
      %p96 = scmp.ne.s32.totalorder %s88, %s91
      %p97 = scmp.eq.s32.totalorder %s14, 0
      %p98 = por %p96, %p97
      %p99 = scmp.ne.s32.totalorder %s88, %s91
      %p100 = scmp.eq.s32.totalorder %s19, 8
      %p101 = por %p99, %p100
      %p102 = scmp.ne.s32.totalorder %s91, %s92
      %p103 = scmp.eq.s32.totalorder %s19, 0
      %p104 = por %p102, %p103
      %p105 = scmp.ne.s32.totalorder %s91, %s92
      %p106 = scmp.eq.s32.totalorder %s20, 8
      %p107 = por %p105, %p106
      %p109 = scmp.ne.s32.totalorder %s92, %s108
      %p110 = scmp.eq.s32.totalorder %s20, 0
      %p111 = por %p109, %p110
      %s112 = ssub.s32 %s22, %s29
      %p113 = scmp.eq.s32.totalorder %s112, 0
      %s115 = sadd.s32 %s114, 1
      %s116 = scalar_select %p113, %s114, %s115
      %p119 = pneg %p113
      %p120 = scmp.eq.s32.totalorder %s14, 8
      %p121 = por %p119, %p120
      %p122 = scmp.ne.s32.totalorder %s114, %s117
      %p123 = scmp.eq.s32.totalorder %s14, 0
      %p124 = por %p122, %p123
      %p125 = scmp.ne.s32.totalorder %s114, %s117
      %p126 = scmp.eq.s32.totalorder %s19, 8
      %p127 = por %p125, %p126
      %p128 = scmp.ne.s32.totalorder %s117, %s118
      %p129 = scmp.eq.s32.totalorder %s19, 0
      %p130 = por %p128, %p129
      %p131 = scmp.ne.s32.totalorder %s117, %s118
      %p132 = scmp.eq.s32.totalorder %s20, 8
      %p133 = por %p131, %p132
      %p135 = scmp.ne.s32.totalorder %s118, %s134
      %p136 = scmp.eq.s32.totalorder %s20, 0
      %p137 = por %p135, %p136
      %s139 = sadd.s32 %s138, 1
      %p142 = scmp.eq.s32.totalorder %s14, 8
      %p143 = scmp.ne.s32.totalorder %s138, %s140
      %p144 = scmp.eq.s32.totalorder %s14, 0
      %p145 = por %p143, %p144
      %p146 = scmp.ne.s32.totalorder %s138, %s140
      %p147 = scmp.eq.s32.totalorder %s19, 8
      %p148 = por %p146, %p147
      %p149 = scmp.ne.s32.totalorder %s140, %s141
      %p150 = scmp.eq.s32.totalorder %s19, 0
      %p151 = por %p149, %p150
      %p152 = scmp.ne.s32.totalorder %s140, %s141
      %p153 = scmp.eq.s32.totalorder %s20, 8
      %p154 = por %p152, %p153
      %p156 = scmp.ne.s32.totalorder %s141, %s155
      %p157 = scmp.eq.s32.totalorder %s20, 0
      %p158 = por %p156, %p157
      %s159 = ssub.s32 %s21, %s33
      %p160 = scmp.eq.s32.totalorder %s159, 0
      %s162 = sadd.s32 %s161, 1
      %s163 = scalar_select %p160, %s161, %s162
      %p166 = pneg %p160
      %p167 = scmp.eq.s32.totalorder %s14, 8
      %p168 = por %p166, %p167
      %p169 = scmp.ne.s32.totalorder %s161, %s164
      %p170 = scmp.eq.s32.totalorder %s14, 0
      %p171 = por %p169, %p170
      %p172 = scmp.ne.s32.totalorder %s161, %s164
      %p173 = scmp.eq.s32.totalorder %s19, 8
      %p174 = por %p172, %p173
      %p175 = scmp.ne.s32.totalorder %s164, %s165
      %p176 = scmp.eq.s32.totalorder %s19, 0
      %p177 = por %p175, %p176
      %p178 = scmp.ne.s32.totalorder %s164, %s165
      %p179 = scmp.eq.s32.totalorder %s20, 8
      %p180 = por %p178, %p179
      %p182 = scmp.ne.s32.totalorder %s165, %s181
      %p183 = scmp.eq.s32.totalorder %s20, 0
      %p184 = por %p182, %p183
      %p185 = scmp.le.s32.totalorder 1, %s14
      %p186 = scmp.lt.s32.totalorder %s14, 10
      %p187 = pnand %p185, %p186
      %p188 = pneg %p187
      // Predicated region
      $region9: #{tpu_custom_call.1} parent=5 // pred_check
        _
      $region10: #{tpu_custom_call.1} parent=5 // pred_check_branch
        %190 = sbr.rel (%p187) target = $region12
      $region11: #{tpu_custom_call.1} parent=5 // pred_region
        %s191 = ssub.s32 %s14, 1
        // Predicated region
        $region13: #{tpu_custom_call.1} parent=11 // pred_check
          %p192 = pneg %p151
        $region14: #{tpu_custom_call.1} parent=11 // pred_check_branch
          %194 = sbr.rel (%p192) target = $region16
        $region15: #{tpu_custom_call.1} parent=11 // pred_region
          _
        $region16: #{tpu_custom_call.1} parent=11 // pred_fallthru
          _
      $region12: #{tpu_custom_call.1} parent=5 // pred_fallthru
        _
      %p195 = scmp.lt.s32.totalorder %s14, 9
      // Predicated region
      $region17: #{tpu_custom_call.1} parent=5 // pred_check
        %p196 = pneg %p195
      $region18: #{tpu_custom_call.1} parent=5 // pred_check_branch
        %198 = sbr.rel (%p196) target = $region20
      $region19: #{tpu_custom_call.1} parent=5 // pred_region
        // Predicated region
        $region21: #{tpu_custom_call.1} parent=19 // pred_check
          %p199 = pneg %p46
        $region22: #{tpu_custom_call.1} parent=19 // pred_check_branch
          %201 = sbr.rel (%p199) target = $region24
        $region23: #{tpu_custom_call.1} parent=19 // pred_region
          %s202 = smul.u32 2, %s21
          %p203 = scmp.lt.s32.totalorder %s202, 5
          %s204 = scalar_select %p203, %s202, 5
          %s205 = smul.addr %s204, 4
          %s206 = scalar_lea.vmem %s0, %s205
          %s207 = smul.u32 2, %s21
        $region24: #{tpu_custom_call.1} parent=19 // pred_fallthru
          _
        // Predicated region
        $region25: #{tpu_custom_call.1} parent=19 // pred_check
          %p208 = pneg %p72
        $region26: #{tpu_custom_call.1} parent=19 // pred_check_branch
          %210 = sbr.rel (%p208) target = $region28
        $region27: #{tpu_custom_call.1} parent=19 // pred_region
          %s211 = sand.u32 %s62, 1
          %s212 = sand.u32 %s62, 1
          %s213 = smul.addr %s212, 32
          %s214 = scalar_lea.vmem [#allocation3], %s213
          %s215 = smul.addr %s22, 4
          %s216 = scalar_lea.vmem %s1, %s215
          // Predicated region
          $region29: #{tpu_custom_call.1} parent=27 // pred_check
            _
          $region30: #{tpu_custom_call.1} parent=27 // pred_check_branch
            %218 = sbr.rel (0) target = $region32
          $region31: #{tpu_custom_call.1} parent=27 // pred_region
            // Predicated region
            $region33: #{tpu_custom_call.1} parent=31 // pred_check
              _
            $region34: #{tpu_custom_call.1} parent=31 // pred_check_branch
              %220 = sbr.rel target = $region36
            $region35: #{tpu_custom_call.1} parent=31 // pred_region
              // Predicated region
              $region48: #{tpu_custom_call.1} parent=35 // pred_check
                _
              $region49: #{tpu_custom_call.1} parent=35 // pred_check_branch
                %250 = sbr.rel (0) target = $region51
              $region50: #{tpu_custom_call.1} parent=35 // pred_region
                loop: start=0, step=1, limit=1
                $region52: #{tpu_custom_call.1} parent=50 // loop_pre_header
                  _
                $region53: #{tpu_custom_call.1} parent=50 // loop_header
                  %s252 = sphi 0, %s256
                  %p253 = scmp.ge.s32.totalorder %s252, 1
                  %s257 = sphi %s216, %s216
                  %s258 = sphi %s214, %s214
                $region54: #{tpu_custom_call.1} parent=50 // loop_header_branch
                  %255 = sbr.rel (%p253) target = $region58
                $region55: #{tpu_custom_call.1} parent=50 // loop_body
                  _
                $region56: #{tpu_custom_call.1} parent=50 // loop_footer
                  %s256 = sadd.s32 1, %s252
                $region57: #{tpu_custom_call.1} parent=50 // loop_footer_branch
                  %251 = sbr.rel target = $region53
                $region58: #{tpu_custom_call.1} parent=50 // loop_exit
                  _
                %s260 = ssub.s32 16, 1
                loop: start=0, step=1, limit=1
                $region59: #{tpu_custom_call.1} parent=50 // loop_pre_header
                  _
                $region60: #{tpu_custom_call.1} parent=50 // loop_header
                  %s262 = sphi 0, %s266
                  %p263 = scmp.ge.s32.totalorder %s262, 1
                  %s267 = sphi %s216, %s216
                  %s268 = sphi %s214, %s214
                $region61: #{tpu_custom_call.1} parent=50 // loop_header_branch
                  %265 = sbr.rel (%p263) target = $region65
                $region62: #{tpu_custom_call.1} parent=50 // loop_body
                  %v269 = vld [vmem:[%s267] sm:%s260]
                  %270 = vst [vmem:[%s268] sm:%s260] %v269
                  %v271 = vld [vmem:[%s267 + $0xc] sm:%s260]
                  %272 = vst [vmem:[%s268 + $0x4] sm:%s260] %v271
                  %v273 = vld [vmem:[%s267 + $0x18] sm:%s260]
                  %274 = vst [vmem:[%s268 + $0x8] sm:%s260] %v273
                  %v275 = vld [vmem:[%s267 + $0x24] sm:%s260]
                  %276 = vst [vmem:[%s268 + $0xc] sm:%s260] %v275
                  %v277 = vld [vmem:[%s267 + $0x30] sm:%s260]
                  %278 = vst [vmem:[%s268 + $0x10] sm:%s260] %v277
                  %v279 = vld [vmem:[%s267 + $0x3c] sm:%s260]
                  %280 = vst [vmem:[%s268 + $0x14] sm:%s260] %v279
                  %v281 = vld [vmem:[%s267 + $0x48] sm:%s260]
                  %282 = vst [vmem:[%s268 + $0x18] sm:%s260] %v281
                  %v283 = vld [vmem:[%s267 + $0x54] sm:%s260]
                  %284 = vst [vmem:[%s268 + $0x1c] sm:%s260] %v283
                $region63: #{tpu_custom_call.1} parent=50 // loop_footer
                  %s266 = sadd.s32 1, %s262
                $region64: #{tpu_custom_call.1} parent=50 // loop_footer_branch
                  %261 = sbr.rel target = $region60
                $region65: #{tpu_custom_call.1} parent=50 // loop_exit
                  _
              $region51: #{tpu_custom_call.1} parent=35 // pred_fallthru
                _
            $region36: #{tpu_custom_call.1} parent=31 // pred_fallthru
              _
            // Predicated region
            $region37: #{tpu_custom_call.1} parent=31 // pred_check
              _
            $region38: #{tpu_custom_call.1} parent=31 // pred_check_branch
              %222 = sbr.rel (0) target = $region40
            $region39: #{tpu_custom_call.1} parent=31 // pred_region
              %s224 = ssub.s32 16, 1
              loop: start=0, step=1, limit=1
              $region41: #{tpu_custom_call.1} parent=39 // loop_pre_header
                _
              $region42: #{tpu_custom_call.1} parent=39 // loop_header
                %s226 = sphi 0, %s230
                %p227 = scmp.ge.s32.totalorder %s226, 1
                %s231 = sphi %s216, %s216
                %s232 = sphi %s214, %s214
              $region43: #{tpu_custom_call.1} parent=39 // loop_header_branch
                %229 = sbr.rel (%p227) target = $region47
              $region44: #{tpu_custom_call.1} parent=39 // loop_body
                %v233 = vld [vmem:[%s231] sm:%s224]
                %234 = vst [vmem:[%s232] sm:%s224] %v233
                %v235 = vld [vmem:[%s231 + $0xc] sm:%s224]
                %236 = vst [vmem:[%s232 + $0x4] sm:%s224] %v235
                %v237 = vld [vmem:[%s231 + $0x18] sm:%s224]
                %238 = vst [vmem:[%s232 + $0x8] sm:%s224] %v237
                %v239 = vld [vmem:[%s231 + $0x24] sm:%s224]
                %240 = vst [vmem:[%s232 + $0xc] sm:%s224] %v239
                %v241 = vld [vmem:[%s231 + $0x30] sm:%s224]
                %242 = vst [vmem:[%s232 + $0x10] sm:%s224] %v241
                %v243 = vld [vmem:[%s231 + $0x3c] sm:%s224]
                %244 = vst [vmem:[%s232 + $0x14] sm:%s224] %v243
                %v245 = vld [vmem:[%s231 + $0x48] sm:%s224]
                %246 = vst [vmem:[%s232 + $0x18] sm:%s224] %v245
                %v247 = vld [vmem:[%s231 + $0x54] sm:%s224]
                %248 = vst [vmem:[%s232 + $0x1c] sm:%s224] %v247
              $region45: #{tpu_custom_call.1} parent=39 // loop_footer
                %s230 = sadd.s32 1, %s226
              $region46: #{tpu_custom_call.1} parent=39 // loop_footer_branch
                %225 = sbr.rel target = $region42
              $region47: #{tpu_custom_call.1} parent=39 // loop_exit
                _
            $region40: #{tpu_custom_call.1} parent=31 // pred_fallthru
              _
          $region32: #{tpu_custom_call.1} parent=27 // pred_fallthru
            _
          %285 = vnop
        $region28: #{tpu_custom_call.1} parent=19 // pred_fallthru
          _
        // Predicated region
        $region66: #{tpu_custom_call.1} parent=19 // pred_check
          %p286 = pneg %p98
        $region67: #{tpu_custom_call.1} parent=19 // pred_check_branch
          %288 = sbr.rel (%p286) target = $region69
        $region68: #{tpu_custom_call.1} parent=19 // pred_region
          %p289 = scmp.lt.s32.totalorder %s22, 2
          %s290 = scalar_select %p289, %s22, 2
          %s291 = scalar_lea.vmem %s2, %s290
        $region69: #{tpu_custom_call.1} parent=19 // pred_fallthru
          _
        // Predicated region
        $region70: #{tpu_custom_call.1} parent=19 // pred_check
          %p292 = pneg %p124
        $region71: #{tpu_custom_call.1} parent=19 // pred_check_branch
          %294 = sbr.rel (%p292) target = $region73
        $region72: #{tpu_custom_call.1} parent=19 // pred_region
          %s295 = smul.u32 16, %s22
          %p296 = scmp.lt.s32.totalorder %s295, 47
          %s297 = scalar_select %p296, %s295, 47
          %s298 = smul.addr %s297, 4
          %s299 = scalar_lea.vmem %s3, %s298
          %s300 = smul.u32 16, %s22
        $region73: #{tpu_custom_call.1} parent=19 // pred_fallthru
          _
      $region20: #{tpu_custom_call.1} parent=5 // pred_fallthru
        _
      %p301 = scmp.le.s32.totalorder 1, %s14
      %p302 = scmp.lt.s32.totalorder %s14, 10
      %p303 = pnand %p301, %p302
      %p304 = pneg %p303
      // Predicated region
      $region74: #{tpu_custom_call.1} parent=5 // pred_check
        _
      $region75: #{tpu_custom_call.1} parent=5 // pred_check_branch
        %306 = sbr.rel (%p303) target = $region77
      $region76: #{tpu_custom_call.1} parent=5 // pred_region
        %s307 = ssub.s32 %s14, 1
        %s308 = sand.u32 %s65, 1
        %s309 = sand.u32 %s65, 1
        %s310 = smul.addr %s309, 32
        %s311 = scalar_lea.vmem [#allocation3], %s310
        // Predicated region
        $region78: #{tpu_custom_call.1} parent=76 // pred_check
          %p312 = pneg %p78
        $region79: #{tpu_custom_call.1} parent=76 // pred_check_branch
          %314 = sbr.rel (%p312) target = $region81
        $region80: #{tpu_custom_call.1} parent=76 // pred_region
          _
        $region81: #{tpu_custom_call.1} parent=76 // pred_fallthru
          _
        %s315 = smul.u32 2, %s23
        %p316 = scmp.lt.s32.totalorder %s315, 5
        %s317 = scalar_select %p316, %s315, 5
        %s318 = smul.addr %s317, 4
        %s319 = scalar_lea.vmem %s0, %s318
        %p320 = pneg %p52
        %p321 = pneg %p49
        %s322 = sand.u32 %s65, 1
        %s323 = sand.u32 %s65, 1
        %s324 = smul.addr %s323, 32
        %s325 = scalar_lea.vmem [#allocation3], %s324
        %p326 = pneg %p78
        %p327 = pneg %p75
        %p328 = scmp.lt.s32.totalorder %s24, 2
        %s329 = scalar_select %p328, %s24, 2
        %s330 = scalar_lea.vmem %s2, %s329
        %p331 = pneg %p104
        %p332 = pneg %p101
        %s333 = smul.u32 16, %s24
        %p334 = scmp.lt.s32.totalorder %s333, 47
        %s335 = scalar_select %p334, %s333, 47
        %s336 = smul.addr %s335, 4
        %s337 = scalar_lea.vmem %s3, %s336
        %p338 = pneg %p130
        %p339 = pneg %p127
        %p340 = pneg %p151
        %p341 = pneg %p148
        %p342 = pneg %p177
        %p343 = pneg %p174
        %s344 = sand.u32 %s164, 1
        %s345 = scalar_lea.sflag [#allocation5], %s344
        %s346 = sand.u32 %s164, 1
        %s347 = smul.addr %s346, 16
        %s348 = scalar_lea.vmem [#allocation4], %s347
        %s349 = smul.u32 2, %s23
        %p350 = scmp.lt.s32.totalorder %s349, 5
        %s351 = scalar_select %p350, %s349, 5
        %s352 = smul.addr %s351, 4
        %s353 = scalar_lea.vmem %s0, %s352
        %s354 = smul.u32 2, %s23
        %p355 = scmp.lt.s32.totalorder %s24, 2
        %s356 = scalar_select %p355, %s24, 2
        %s357 = scalar_lea.vmem %s2, %s356
        %s358 = smul.u32 16, %s24
        %p359 = scmp.lt.s32.totalorder %s358, 47
        %s360 = scalar_select %p359, %s358, 47
        %s361 = smul.addr %s360, 4
        %s362 = scalar_lea.vmem %s3, %s361
        %s363 = smul.u32 16, %s24
        %s364 = smul.u32 2, %s23
        %p366 = scmp.eq.s32.totalorder %s24, 0
        // Predicated region
        $region82: #{tpu_custom_call.1} parent=76 // pred_check
          %p367 = pneg %p366
        $region83: #{tpu_custom_call.1} parent=76 // pred_check_branch
          %369 = sbr.rel (%p367) target = $region85
        $region84: #{tpu_custom_call.1} parent=76 // pred_region
          %vm370 = vcmask 523264
          %371 = vst.msk [vmem:[#allocation2] sm:$0xff] %vm370, 0.0
          %372 = vst.msk [vmem:[#allocation2 + $0x8] sm:$0xff] %vm370, 0.0
        $region85: #{tpu_custom_call.1} parent=76 // pred_fallthru
          _
        %v373 = vld [vmem:[%s353] sm:$0xf]
        %v374 = vld [vmem:[%s353 + $0x4] sm:$0xf]
        %v375 = vld [vmem:[%s311] sm:$0xf]
        %v376 = vld [vmem:[%s311 + $0x4] sm:$0xf]
        %v377 = vld [vmem:[%s311 + $0x8] sm:$0xf]
        %v378 = vld [vmem:[%s311 + $0xc] sm:$0xf]
        %v379 = vld [vmem:[%s311 + $0x10] sm:$0xf]
        %v380 = vld [vmem:[%s311 + $0x14] sm:$0xf]
        %v381 = vld [vmem:[%s311 + $0x18] sm:$0xf]
        %v382 = vld [vmem:[%s311 + $0x1c] sm:$0xf]
        %v383 = vld [vmem:[%s357] sm:$0x1]
        %v385 = vperm.slane %v383, 0
        %v389 = vunpack.c.l.b16 %v373
        %v390 = vunpack.c.l.b16 %v374
        %v391 = vpack.c.b16 %v390, %v389
        %v400 = vunpack.c.l.b16 %v375
        %v401 = vunpack.c.l.b16 %v376
        %v402 = vunpack.c.l.b16 %v377
        %v403 = vunpack.c.l.b16 %v378
        %v404 = vunpack.c.l.b16 %v379
        %v405 = vunpack.c.l.b16 %v380
        %v406 = vunpack.c.l.b16 %v381
        %v407 = vunpack.c.l.b16 %v382
        %v408 = vpack.c.b16 %v401, %v400
        %v409 = vpack.c.b16 %v403, %v402
        %v410 = vpack.c.b16 %v405, %v404
        %v411 = vpack.c.b16 %v407, %v406
        %vm416 = vcmask 523264
        %v418 = vsel %vm416, %v391, 0
        %420 = vmatpush.bf16.msra.mxu0 0
        %421 = vmatpush.bf16.msra.mxu0 0
        %422 = vmatpush.bf16.msra.mxu0 0
        %423 = vmatpush.bf16.msra.mxu0 0
        %424 = vmatpush.bf16.msra.mxu0 %v411
        %425 = vmatpush.bf16.msra.mxu0 %v410
        %426 = vmatpush.bf16.msra.mxu0 %v409
        %427 = vmatpush.bf16.msra.mxu0 %v408
        %428 = vmatmul.bf16.gmra.mxu0 %v418
        %v429 = vpop.f32.mrf.mxu0
        %v430 = vadd.f32 %v385, %v429
        %v431 = vpop.f32.mrf.mxu0
        %v432 = vadd.f32 %v385, %v431
        %433 = vdwg.mxu0
        %v434 = vmax.f32 %v430, 0.0
        %v435 = vmax.f32 %v432, 0.0
        %v436 = vld [vmem:[#allocation2] sm:$0xff]
        %v437 = vld [vmem:[#allocation2 + $0x8] sm:$0xff]
        %v438 = vpack.c.bf16 %v435, %v434
        %v439 = vld [vmem:[%s362] sm:$0xf]
        %v440 = vld [vmem:[%s362 + $0x4] sm:$0xf]
        %v441 = vld [vmem:[%s362 + $0x8] sm:$0xf]
        %v442 = vld [vmem:[%s362 + $0xc] sm:$0xf]
        %v443 = vld [vmem:[%s362 + $0x10] sm:$0xf]
        %v444 = vld [vmem:[%s362 + $0x14] sm:$0xf]
        %v445 = vld [vmem:[%s362 + $0x18] sm:$0xf]
        %v446 = vld [vmem:[%s362 + $0x1c] sm:$0xf]
        %v447 = vld [vmem:[%s362 + $0x20] sm:$0xf]
        %v448 = vld [vmem:[%s362 + $0x24] sm:$0xf]
        %v449 = vld [vmem:[%s362 + $0x28] sm:$0xf]
        %v450 = vld [vmem:[%s362 + $0x2c] sm:$0xf]
        %v451 = vld [vmem:[%s362 + $0x30] sm:$0xf]
        %v452 = vld [vmem:[%s362 + $0x34] sm:$0xf]
        %v453 = vld [vmem:[%s362 + $0x38] sm:$0xf]
        %v454 = vld [vmem:[%s362 + $0x3c] sm:$0xf]
        %v471 = vunpack.c.l.b16 %v439
        %v472 = vunpack.c.l.b16 %v440
        %v473 = vunpack.c.l.b16 %v441
        %v474 = vunpack.c.l.b16 %v442
        %v475 = vunpack.c.l.b16 %v443
        %v476 = vunpack.c.l.b16 %v444
        %v477 = vunpack.c.l.b16 %v445
        %v478 = vunpack.c.l.b16 %v446
        %v479 = vunpack.c.l.b16 %v447
        %v480 = vunpack.c.l.b16 %v448
        %v481 = vunpack.c.l.b16 %v449
        %v482 = vunpack.c.l.b16 %v450
        %v483 = vunpack.c.l.b16 %v451
        %v484 = vunpack.c.l.b16 %v452
        %v485 = vunpack.c.l.b16 %v453
        %v486 = vunpack.c.l.b16 %v454
        %v487 = vpack.c.b16 %v472, %v471
        %v488 = vpack.c.b16 %v474, %v473
        %v489 = vpack.c.b16 %v476, %v475
        %v490 = vpack.c.b16 %v478, %v477
        %v491 = vpack.c.b16 %v480, %v479
        %v492 = vpack.c.b16 %v482, %v481
        %v493 = vpack.c.b16 %v484, %v483
        %v494 = vpack.c.b16 %v486, %v485
        %503 = vmatpush.bf16.msra.mxu0 %v494
        %504 = vmatpush.bf16.msra.mxu0 %v493
        %505 = vmatpush.bf16.msra.mxu0 %v492
        %506 = vmatpush.bf16.msra.mxu0 %v491
        %507 = vmatpush.bf16.msra.mxu0 %v490
        %508 = vmatpush.bf16.msra.mxu0 %v489
        %509 = vmatpush.bf16.msra.mxu0 %v488
        %510 = vmatpush.bf16.msra.mxu0 %v487
        %511 = vmatmul.bf16.gmra.mxu0 %v438
        %v512 = vpop.f32.mrf.mxu0
        %v513 = vadd.f32 0.0, %v512
        %v514 = vpop.f32.mrf.mxu0
        %v515 = vadd.f32 0.0, %v514
        %516 = vdwg.mxu0
        %v517 = vadd.f32 %v436, %v513
        %v518 = vadd.f32 %v437, %v515
        %519 = vst.msk [vmem:[#allocation2] sm:$0xff] %vm416, %v517
        %520 = vst.msk [vmem:[#allocation2 + $0x8] sm:$0xff] %vm416, %v518
        %p521 = scmp.eq.s32.totalorder %s24, 2
        // Predicated region
        $region86: #{tpu_custom_call.1} parent=76 // pred_check
          %p522 = pneg %p521
        $region87: #{tpu_custom_call.1} parent=76 // pred_check_branch
          %524 = sbr.rel (%p522) target = $region89
        $region88: #{tpu_custom_call.1} parent=76 // pred_region
          %v525 = vld [vmem:[#allocation2] sm:$0xff]
          %v526 = vld [vmem:[#allocation2 + $0x8] sm:$0xff]
          %v527 = vld [vmem:[%s4] sm:$0x1]
          %v529 = vperm.slane %v527, 0
          %v531 = vadd.f32 %v525, %v529
          %v532 = vadd.f32 %v526, %v529
          %533 = vst.msk [vmem:[%s348] sm:$0xff] %vm416, %v531
          %534 = vst.msk [vmem:[%s348 + $0x8] sm:$0xff] %vm416, %v532
        $region89: #{tpu_custom_call.1} parent=76 // pred_fallthru
          _
        %s535 = sand.u32 %s164, 1
        %s536 = scalar_lea.sflag [#allocation5], %s535
        %s537 = sand.u32 %s164, 1
        %s538 = smul.addr %s537, 16
        %s539 = scalar_lea.vmem [#allocation4], %s538
        // Predicated region
        $region90: #{tpu_custom_call.1} parent=76 // pred_check
          %p540 = pneg %p174
        $region91: #{tpu_custom_call.1} parent=76 // pred_check_branch
          %542 = sbr.rel (%p540) target = $region93
        $region92: #{tpu_custom_call.1} parent=76 // pred_region
          %s543 = smul.u32 2, %s23
          %545 = vsyncadd %s536, 0
          %s546 = smul.addr %s543, 8
          %s547 = scalar_lea.hbm %s5, %s546
          %s548 = sshll.u32 %s539, 4
          %s549 = int_to_ptr.vmem [resolvable:$true] %s548
          %s550 = sshll.u32 %s547, 4
          %s551 = int_to_ptr.hbm [resolvable:$true] %s550
          %556 = dma.vmem_to_hbm [thread:$0]  %s549, 256, %s551, %s536, 128, 128, 8
        $region93: #{tpu_custom_call.1} parent=76 // pred_fallthru
          _
      $region77: #{tpu_custom_call.1} parent=5 // pred_fallthru
        _
      %p557 = scmp.le.s32.totalorder 2, %s14
      // Predicated region
      $region94: #{tpu_custom_call.1} parent=5 // pred_check
        %p558 = pneg %p557
      $region95: #{tpu_custom_call.1} parent=5 // pred_check_branch
        %560 = sbr.rel (%p558) target = $region97
      $region96: #{tpu_custom_call.1} parent=5 // pred_region
        %s561 = ssub.s32 %s14, 2
        // Predicated region
        $region98: #{tpu_custom_call.1} parent=96 // pred_check
          %p562 = pneg %p180
        $region99: #{tpu_custom_call.1} parent=96 // pred_check_branch
          %564 = sbr.rel (%p562) target = $region101
        $region100: #{tpu_custom_call.1} parent=96 // pred_region
          %s565 = sand.u32 %s165, 1
          %s566 = scalar_lea.sflag [#allocation5], %s565
          %s567 = sand.u32 %s165, 1
          %s568 = smul.addr %s567, 16
          %s569 = scalar_lea.vmem [#allocation4], %s568
          %571 = dma.done %s566, 256
        $region101: #{tpu_custom_call.1} parent=96 // pred_fallthru
          _
      $region97: #{tpu_custom_call.1} parent=5 // pred_fallthru
        _
    $region6: #{tpu_custom_call.1} parent=1 // loop_footer
      %s18 = sadd.s32 1, %s14
    $region7: #{tpu_custom_call.1} parent=1 // loop_footer_branch
      %13 = sbr.rel target = $region3
    $region8: #{tpu_custom_call.1} parent=1 // loop_exit
      _
    %572 = vsyncpa [#allocation5], 1
    %s573 = scalar_lea.sflag [#allocation5], 1
    %574 = vsyncpa %s573, 1

</llo_original>
